<compile_context>
chip_gen: v7x
topology: tpu7x:2x2x1
jax: 0.10.0
libtpu: 0.0.40
codegen_flags: <defaults>
</compile_context>

<pallas_src>
import math

import jax
import jax.numpy as jnp
from jax import lax
from jax.experimental import pallas as pl
from jax.experimental.pallas import tpu as pltpu


# Contract the last dim of both operands ("A @ B^T"); Mosaic lowers this MXU
# pattern directly (same dimension numbers used by the TPU flash-attention op).
_TRANS_B_DIMS = (((1,), (1,)), ((), ()))


def _mlp_kernel(x_ref,
                w1_ref, b1_ref,
                w2_ref, b2_ref,
                w3_ref, b3_ref,
                w4_ref, b4_ref,
                w5_ref, b5_ref,
                o_ref):
    # x block: (TILE_B, n_features) f32 -> bf16 cast in-kernel (VPU, hides
    # under the MXU; no host HBM pre-pass over x).
    x = x_ref[...].astype(jnp.bfloat16)

    # Layer 1: Linear(n_features, 50) [+ folded BN] + ReLU  (Dropout(0.5) = id)
    # (50, F) contracted with (TILE_B, F) on F  ->  (50, TILE_B); from here on
    # batch lives in the lane dimension.
    h = lax.dot_general(w1_ref[...], x, _TRANS_B_DIMS,
                        preferred_element_type=jnp.float32)
    h = jnp.maximum(h + b1_ref[...], 0.0)

    # Layer 2: Linear(50, 100) [+ folded BN] + ReLU         (Dropout(0.5) = id)
    h = jnp.dot(w2_ref[...], h.astype(w2_ref.dtype),
                preferred_element_type=jnp.float32)
    h = jnp.maximum(h + b2_ref[...], 0.0)

    # Layer 3: Linear(100, 50) [+ folded BN] + ReLU         (Dropout(0.1) = id)
    h = jnp.dot(w3_ref[...], h.astype(w3_ref.dtype),
                preferred_element_type=jnp.float32)
    h = jnp.maximum(h + b3_ref[...], 0.0)

    # Layer 4: Linear(50, 10) [+ folded BN] + ReLU
    h = jnp.dot(w4_ref[...], h.astype(w4_ref.dtype),
                preferred_element_type=jnp.float32)
    h = jnp.maximum(h + b4_ref[...], 0.0)

    # Layer 5: Linear(10, n_classes)  ->  (n_classes, TILE_B), lane-dense store.
    o_ref[...] = (jnp.dot(w5_ref[...], h.astype(w5_ref.dtype),
                          preferred_element_type=jnp.float32) + b5_ref[...])


def _batch_tile(B, max_tile=2048, min_grid=2):
    """Balanced batch tiling: >=2 tiles when B is large (v7x dual-TC), tiles a
    multiple of 128 (lane-dense output), last tile ragged instead of padded."""
    if B <= 256:
        return B, 1                      # single full-extent tile (exempt from the /128 rule)
    n_tiles = max(min_grid, pl.cdiv(B, max_tile))
    tb = ((pl.cdiv(B, n_tiles) + 127) // 128) * 128
    return tb, pl.cdiv(B, tb)


def iqm_mlp4_forward(x, folded_params, *, max_tile_b=2048):
    """x: (B, n_features) float32.
    folded_params: (w1,b1,...,w5,b5) with W stored transposed (out, in) in
    bf16 and b stored (out, 1) in f32 (see fold_params)."""
    B, n_features = x.shape
    n_classes = folded_params[-2].shape[0]

    tb, n_tiles = _batch_tile(B, max_tile_b)

    def const_spec(a):
        # Full-shape block, same block every grid step -> DMA'd once, resident.
        return pl.BlockSpec(a.shape, lambda i: (0, 0))

    in_specs = [pl.BlockSpec((tb, n_features), lambda i: (i, 0))]
    in_specs += [const_spec(p) for p in folded_params]
    out_specs = pl.BlockSpec((n_classes, tb), lambda i: (0, i))

    out_t = pl.pallas_call(
        _mlp_kernel,
        out_shape=jax.ShapeDtypeStruct((n_classes, B), jnp.float32),
        grid=(n_tiles,),
        in_specs=in_specs,
        out_specs=out_specs,
        compiler_params=pltpu.CompilerParams(
            dimension_semantics=("parallel",),     # shard batch tiles over TCs (v7x)
            vmem_limit_bytes=32 * 1024 * 1024,     # safe on v5e/v6e/v7x; usage ~2 MiB
        ),
    )(x, *folded_params)

    # Tiny host transpose of the (n_classes, B) logits back to (B, n_classes).
    return out_t.T


# ---------------------------------------------------------------------------
# Parameter construction (matches the PyTorch module at init) + BN/bias folding.
# ---------------------------------------------------------------------------

def _xavier_normal(key, fan_in, fan_out):
    # torch.nn.init.xavier_normal_ std; stored as (in, out) like x @ W.
    std = math.sqrt(2.0 / (fan_in + fan_out))
    return std * jax.random.normal(key, (fan_in, fan_out), dtype=jnp.float32)


def make_params(key, n_features, n_classes):
    """Per-layer tuples: (W, b, gamma, beta, running_mean, running_var) or (W, b)."""
    dims = [(n_features, 50), (50, 100), (100, 50), (50, 10), (10, n_classes)]
    keys = jax.random.split(key, len(dims))
    layers = []
    for i, (fi, fo) in enumerate(dims):
        w = _xavier_normal(keys[i], fi, fo)
        b = jnp.zeros((fo,), dtype=jnp.float32)            # nn.init.constant_(bias, 0)
        if i < len(dims) - 1:
            gamma = jnp.ones((fo,), jnp.float32)           # BatchNorm1d defaults
            beta = jnp.zeros((fo,), jnp.float32)
            mean = jnp.zeros((fo,), jnp.float32)
            var = jnp.ones((fo,), jnp.float32)
            layers.append((w, b, gamma, beta, mean, var))
        else:
            layers.append((w, b))
    return layers


def fold_params(layers, eps=1e-5, weight_dtype=jnp.bfloat16):
    """Fold eval-mode BatchNorm + Linear bias into each Linear and transpose
    for the batch-in-lanes layout:  y_T = W'_T @ x_T + b'_T."""
    folded = []
    for layer in layers:
        if len(layer) == 6:
            w, b, gamma, beta, mean, var = layer
            scale = gamma / jnp.sqrt(var + eps)            # per output feature
            w_f = w * scale[None, :]
            b_f = (b - mean) * scale + beta
        else:
            w_f, b_f = layer
        folded.append(jnp.transpose(w_f).astype(weight_dtype))   # (out, in) bf16
        folded.append(b_f.reshape(-1, 1).astype(jnp.float32))    # (out, 1) f32
    return tuple(folded)


# ---------------------------------------------------------------------------
# References.
# ---------------------------------------------------------------------------

def reference_forward_f32(x, layers, eps=1e-5):
    """Pure-f32 IQMMLP4.forward in eval mode (Dropout = identity)."""
    h = x
    for layer in layers:
        if len(layer) == 6:
            w, b, gamma, beta, mean, var = layer
            h = h @ w + b
            h = (h - mean) / jnp.sqrt(var + eps) * gamma + beta
            h = jnp.maximum(h, 0.0)
        else:
            w, b = layer
            h = h @ w + b
    return h


def reference_forward_folded(x, folded):
    """Same math/dtypes/orientation as the kernel: bf16 matmul inputs,
    f32 accumulate + elementwise, batch in the trailing axis."""
    h = x.astype(jnp.bfloat16).T                      # (F, B)
    n = len(folded) // 2
    for i in range(n):
        w, b = folded[2 * i], folded[2 * i + 1]       # (out, in) bf16, (out, 1) f32
        h = jnp.dot(w, h, preferred_element_type=jnp.float32) + b
        if i < n - 1:
            h = jnp.maximum(h, 0.0).astype(jnp.bfloat16)
    return h.T                                        # (B, n_classes)


if __name__ == "__main__":
    n_features, n_classes = 32, 4
    key = jax.random.PRNGKey(0)
    kx, kx2, kp = jax.random.split(key, 3)

    layers = make_params(kp, n_features, n_classes)
    folded = fold_params(layers)

    # Small single-tile path.
    B = 8
    x = jax.random.normal(kx, (B, n_features), dtype=jnp.float32)
    out = jax.block_until_ready(iqm_mlp4_forward(x, folded))
    assert out.shape == (B, n_classes)
    assert jnp.allclose(out, reference_forward_folded(x, folded), atol=1e-2, rtol=1e-2)
    assert jnp.allclose(out, reference_forward_f32(x, layers), atol=5e-2, rtol=5e-2)

    # Multi-tile + ragged-last-block path (2 tiles of 256, last tile 44 valid rows).
    B2 = 300
    x2 = jax.random.normal(kx2, (B2, n_features), dtype=jnp.float32)
    out2 = jax.block_until_ready(iqm_mlp4_forward(x2, folded, max_tile_b=256))
    assert out2.shape == (B2, n_classes)
    assert jnp.allclose(out2, reference_forward_folded(x2, folded), atol=1e-2, rtol=1e-2)
    assert jnp.allclose(out2, reference_forward_f32(x2, layers), atol=5e-2, rtol=5e-2)

    print("KERNEL_OK")
</pallas_src>

<mosaic_0001>
module attributes {stable_mosaic.version = 11 : i64} {
  func.func @_mlp_kernel(%arg0: i32, %arg1: memref<8x32xf32, #tpu.memory_space<vmem>>, %arg2: memref<50x32xbf16, #tpu.memory_space<vmem>>, %arg3: memref<50x1xf32, #tpu.memory_space<vmem>>, %arg4: memref<100x50xbf16, #tpu.memory_space<vmem>>, %arg5: memref<100x1xf32, #tpu.memory_space<vmem>>, %arg6: memref<50x100xbf16, #tpu.memory_space<vmem>>, %arg7: memref<50x1xf32, #tpu.memory_space<vmem>>, %arg8: memref<10x50xbf16, #tpu.memory_space<vmem>>, %arg9: memref<10x1xf32, #tpu.memory_space<vmem>>, %arg10: memref<4x10xbf16, #tpu.memory_space<vmem>>, %arg11: memref<4x1xf32, #tpu.memory_space<vmem>>, %arg12: memref<4x8xf32, #tpu.memory_space<vmem>>) attributes {dimension_semantics = [#tpu.dimension_semantics<parallel>], iteration_bounds = array<i64: 1>, scalar_prefetch = 0 : i64, scratch_operands = 0 : i64, tpu.core_type = #tpu.core_type<tc>, window_params = [{transform_indices = @transform_0, window_bounds = array<i64: 8, 32>}, {pipeline_mode = #tpu.pipeline_mode<synchronous>, transform_indices = @transform_1, window_bounds = array<i64: 50, 32>}, {pipeline_mode = #tpu.pipeline_mode<synchronous>, transform_indices = @transform_2, window_bounds = array<i64: 50, 1>}, {pipeline_mode = #tpu.pipeline_mode<synchronous>, transform_indices = @transform_3, window_bounds = array<i64: 100, 50>}, {pipeline_mode = #tpu.pipeline_mode<synchronous>, transform_indices = @transform_4, window_bounds = array<i64: 100, 1>}, {pipeline_mode = #tpu.pipeline_mode<synchronous>, transform_indices = @transform_5, window_bounds = array<i64: 50, 100>}, {pipeline_mode = #tpu.pipeline_mode<synchronous>, transform_indices = @transform_6, window_bounds = array<i64: 50, 1>}, {pipeline_mode = #tpu.pipeline_mode<synchronous>, transform_indices = @transform_7, window_bounds = array<i64: 10, 50>}, {pipeline_mode = #tpu.pipeline_mode<synchronous>, transform_indices = @transform_8, window_bounds = array<i64: 10, 1>}, {pipeline_mode = #tpu.pipeline_mode<synchronous>, transform_indices = @transform_9, window_bounds = array<i64: 4, 10>}, {pipeline_mode = #tpu.pipeline_mode<synchronous>, transform_indices = @transform_10, window_bounds = array<i64: 4, 1>}, {transform_indices = @transform_11, window_bounds = array<i64: 4, 8>}]} {
    %c0 = arith.constant 0 : index
    %c0_0 = arith.constant 0 : index
    %0 = vector.load %arg1[%c0, %c0_0] : memref<8x32xf32, #tpu.memory_space<vmem>>, vector<8x32xf32>
    %1 = arith.truncf %0 : vector<8x32xf32> to vector<8x32xbf16>
    %c0_1 = arith.constant 0 : index
    %c0_2 = arith.constant 0 : index
    %2 = vector.load %arg2[%c0_1, %c0_2] : memref<50x32xbf16, #tpu.memory_space<vmem>>, vector<50x32xbf16>
    %cst = arith.constant dense<0.000000e+00> : vector<50x8xf32>
    %3 = tpu.matmul %2, %1, %cst {dimension_numbers = #tpu.dot_dimension_numbers<[1], [1], [0], [0], [0, 0, 1, 0], [], []>} : vector<50x32xbf16>, vector<8x32xbf16>, vector<50x8xf32> -> vector<50x8xf32>
    %c0_3 = arith.constant 0 : index
    %c0_4 = arith.constant 0 : index
    %4 = vector.load %arg3[%c0_3, %c0_4] : memref<50x1xf32, #tpu.memory_space<vmem>>, vector<50x1xf32>
    %5 = vector.broadcast %4 : vector<50x1xf32> to vector<50x8xf32>
    %6 = arith.addf %3, %5 : vector<50x8xf32>
    %cst_5 = arith.constant 0.000000e+00 : f32
    %7 = vector.broadcast %cst_5 : f32 to vector<50x8xf32>
    %8 = arith.maximumf %6, %7 : vector<50x8xf32>
    %c0_6 = arith.constant 0 : index
    %c0_7 = arith.constant 0 : index
    %9 = vector.load %arg4[%c0_6, %c0_7] : memref<100x50xbf16, #tpu.memory_space<vmem>>, vector<100x50xbf16>
    %10 = arith.truncf %8 : vector<50x8xf32> to vector<50x8xbf16>
    %cst_8 = arith.constant dense<0.000000e+00> : vector<100x8xf32>
    %11 = tpu.matmul %9, %10, %cst_8 {dimension_numbers = #tpu.dot_dimension_numbers<[1], [0], [0], [1], [0, 0, 1, 1], [], []>} : vector<100x50xbf16>, vector<50x8xbf16>, vector<100x8xf32> -> vector<100x8xf32>
    %c0_9 = arith.constant 0 : index
    %c0_10 = arith.constant 0 : index
    %12 = vector.load %arg5[%c0_9, %c0_10] : memref<100x1xf32, #tpu.memory_space<vmem>>, vector<100x1xf32>
    %13 = vector.broadcast %12 : vector<100x1xf32> to vector<100x8xf32>
    %14 = arith.addf %11, %13 : vector<100x8xf32>
    %cst_11 = arith.constant 0.000000e+00 : f32
    %15 = vector.broadcast %cst_11 : f32 to vector<100x8xf32>
    %16 = arith.maximumf %14, %15 : vector<100x8xf32>
    %c0_12 = arith.constant 0 : index
    %c0_13 = arith.constant 0 : index
    %17 = vector.load %arg6[%c0_12, %c0_13] : memref<50x100xbf16, #tpu.memory_space<vmem>>, vector<50x100xbf16>
    %18 = arith.truncf %16 : vector<100x8xf32> to vector<100x8xbf16>
    %cst_14 = arith.constant dense<0.000000e+00> : vector<50x8xf32>
    %19 = tpu.matmul %17, %18, %cst_14 {dimension_numbers = #tpu.dot_dimension_numbers<[1], [0], [0], [1], [0, 0, 1, 1], [], []>} : vector<50x100xbf16>, vector<100x8xbf16>, vector<50x8xf32> -> vector<50x8xf32>
    %c0_15 = arith.constant 0 : index
    %c0_16 = arith.constant 0 : index
    %20 = vector.load %arg7[%c0_15, %c0_16] : memref<50x1xf32, #tpu.memory_space<vmem>>, vector<50x1xf32>
    %21 = vector.broadcast %20 : vector<50x1xf32> to vector<50x8xf32>
    %22 = arith.addf %19, %21 : vector<50x8xf32>
    %cst_17 = arith.constant 0.000000e+00 : f32
    %23 = vector.broadcast %cst_17 : f32 to vector<50x8xf32>
    %24 = arith.maximumf %22, %23 : vector<50x8xf32>
    %c0_18 = arith.constant 0 : index
    %c0_19 = arith.constant 0 : index
    %25 = vector.load %arg8[%c0_18, %c0_19] : memref<10x50xbf16, #tpu.memory_space<vmem>>, vector<10x50xbf16>
    %26 = arith.truncf %24 : vector<50x8xf32> to vector<50x8xbf16>
    %cst_20 = arith.constant dense<0.000000e+00> : vector<10x8xf32>
    %27 = tpu.matmul %25, %26, %cst_20 {dimension_numbers = #tpu.dot_dimension_numbers<[1], [0], [0], [1], [0, 0, 1, 1], [], []>} : vector<10x50xbf16>, vector<50x8xbf16>, vector<10x8xf32> -> vector<10x8xf32>
    %c0_21 = arith.constant 0 : index
    %c0_22 = arith.constant 0 : index
    %28 = vector.load %arg9[%c0_21, %c0_22] : memref<10x1xf32, #tpu.memory_space<vmem>>, vector<10x1xf32>
    %29 = vector.broadcast %28 : vector<10x1xf32> to vector<10x8xf32>
    %30 = arith.addf %27, %29 : vector<10x8xf32>
    %cst_23 = arith.constant 0.000000e+00 : f32
    %31 = vector.broadcast %cst_23 : f32 to vector<10x8xf32>
    %32 = arith.maximumf %30, %31 : vector<10x8xf32>
    %c0_24 = arith.constant 0 : index
    %c0_25 = arith.constant 0 : index
    %33 = vector.load %arg10[%c0_24, %c0_25] : memref<4x10xbf16, #tpu.memory_space<vmem>>, vector<4x10xbf16>
    %34 = arith.truncf %32 : vector<10x8xf32> to vector<10x8xbf16>
    %cst_26 = arith.constant dense<0.000000e+00> : vector<4x8xf32>
    %35 = tpu.matmul %33, %34, %cst_26 {dimension_numbers = #tpu.dot_dimension_numbers<[1], [0], [0], [1], [0, 0, 1, 1], [], []>} : vector<4x10xbf16>, vector<10x8xbf16>, vector<4x8xf32> -> vector<4x8xf32>
    %c0_27 = arith.constant 0 : index
    %c0_28 = arith.constant 0 : index
    %36 = vector.load %arg11[%c0_27, %c0_28] : memref<4x1xf32, #tpu.memory_space<vmem>>, vector<4x1xf32>
    %37 = vector.broadcast %36 : vector<4x1xf32> to vector<4x8xf32>
    %38 = arith.addf %35, %37 : vector<4x8xf32>
    %c0_29 = arith.constant 0 : index
    %c0_30 = arith.constant 0 : index
    %39 = vector.load %arg12[%c0_29, %c0_30] : memref<4x8xf32, #tpu.memory_space<vmem>>, vector<4x8xf32>
    tpu.vector_store %arg12[%c0_29, %c0_30], %38 {strides = array<i32>} : memref<4x8xf32, #tpu.memory_space<vmem>>, vector<4x8xf32>,
    return
  }
  func.func @transform_0(%arg0: i32) -> (i32, i32) {
    %c0_i32 = arith.constant 0 : i32
    %c0_i32_0 = arith.constant 0 : i32
    return %arg0, %c0_i32 : i32, i32
  }
  func.func @transform_1(%arg0: i32) -> (i32, i32) {
    %c0_i32 = arith.constant 0 : i32
    %c0_i32_0 = arith.constant 0 : i32
    %c0_i32_1 = arith.constant 0 : i32
    return %c0_i32, %c0_i32_0 : i32, i32
  }
  func.func @transform_2(%arg0: i32) -> (i32, i32) {
    %c0_i32 = arith.constant 0 : i32
    %c0_i32_0 = arith.constant 0 : i32
    %c0_i32_1 = arith.constant 0 : i32
    return %c0_i32, %c0_i32_0 : i32, i32
  }
  func.func @transform_3(%arg0: i32) -> (i32, i32) {
    %c0_i32 = arith.constant 0 : i32
    %c0_i32_0 = arith.constant 0 : i32
    %c0_i32_1 = arith.constant 0 : i32
    return %c0_i32, %c0_i32_0 : i32, i32
  }
  func.func @transform_4(%arg0: i32) -> (i32, i32) {
    %c0_i32 = arith.constant 0 : i32
    %c0_i32_0 = arith.constant 0 : i32
    %c0_i32_1 = arith.constant 0 : i32
    return %c0_i32, %c0_i32_0 : i32, i32
  }
  func.func @transform_5(%arg0: i32) -> (i32, i32) {
    %c0_i32 = arith.constant 0 : i32
    %c0_i32_0 = arith.constant 0 : i32
    %c0_i32_1 = arith.constant 0 : i32
    return %c0_i32, %c0_i32_0 : i32, i32
  }
  func.func @transform_6(%arg0: i32) -> (i32, i32) {
    %c0_i32 = arith.constant 0 : i32
    %c0_i32_0 = arith.constant 0 : i32
    %c0_i32_1 = arith.constant 0 : i32
    return %c0_i32, %c0_i32_0 : i32, i32
  }
  func.func @transform_7(%arg0: i32) -> (i32, i32) {
    %c0_i32 = arith.constant 0 : i32
    %c0_i32_0 = arith.constant 0 : i32
    %c0_i32_1 = arith.constant 0 : i32
    return %c0_i32, %c0_i32_0 : i32, i32
  }
  func.func @transform_8(%arg0: i32) -> (i32, i32) {
    %c0_i32 = arith.constant 0 : i32
    %c0_i32_0 = arith.constant 0 : i32
    %c0_i32_1 = arith.constant 0 : i32
    return %c0_i32, %c0_i32_0 : i32, i32
  }
  func.func @transform_9(%arg0: i32) -> (i32, i32) {
    %c0_i32 = arith.constant 0 : i32
    %c0_i32_0 = arith.constant 0 : i32
    %c0_i32_1 = arith.constant 0 : i32
    return %c0_i32, %c0_i32_0 : i32, i32
  }
  func.func @transform_10(%arg0: i32) -> (i32, i32) {
    %c0_i32 = arith.constant 0 : i32
    %c0_i32_0 = arith.constant 0 : i32
    %c0_i32_1 = arith.constant 0 : i32
    return %c0_i32, %c0_i32_0 : i32, i32
  }
  func.func @transform_11(%arg0: i32) -> (i32, i32) {
    %c0_i32 = arith.constant 0 : i32
    %c0_i32_0 = arith.constant 0 : i32
    return %c0_i32, %arg0 : i32, i32
  }
}

</mosaic_0001>

<llo_original>
// kernel: tpu_custom_call.1
$region0: #{tpu_custom_call.1}
  #allocation0 [shape = 'u32[]', space=smem, size = 0x4, offset = 0x4, fixed_abs, tag = 'smem constant byte address 0x4 - core index']
  #allocation1 [shape = 'u32[144,128]{1,0:T(1,128)}', space=vmem, size = 0x12000, scoped, tag = 'internal scratch']
  %s0 = inlined_call_operand.vmem [shape: f32[8,32], index: 0, kind: input, shape index: {}]
  %s1 = inlined_call_operand.vmem [shape: bf16[50,32], index: 1, kind: input, shape index: {}]
  %s2 = inlined_call_operand.vmem [shape: f32[50,1], index: 2, kind: input, shape index: {}]
  %s3 = inlined_call_operand.vmem [shape: bf16[100,50], index: 3, kind: input, shape index: {}]
  %s4 = inlined_call_operand.vmem [shape: f32[100,1], index: 4, kind: input, shape index: {}]
  %s5 = inlined_call_operand.vmem [shape: bf16[50,100], index: 5, kind: input, shape index: {}]
  %s6 = inlined_call_operand.vmem [shape: f32[50,1], index: 6, kind: input, shape index: {}]
  %s7 = inlined_call_operand.vmem [shape: bf16[10,50], index: 7, kind: input, shape index: {}]
  %s8 = inlined_call_operand.vmem [shape: f32[10,1], index: 8, kind: input, shape index: {}]
  %s9 = inlined_call_operand.vmem [shape: bf16[4,10], index: 9, kind: input, shape index: {}]
  %s10 = inlined_call_operand.vmem [shape: f32[4,1], index: 10, kind: input, shape index: {}]
  %s11 = inlined_call_operand.hbm [shape: f32[4,8], index: 11, kind: output, shape index: {}]
  %s12 = sld [smem:[#allocation0]]
  $region54: #{tpu_custom_call.1} parent=0
    _
  %s14 = ssub.s32 1, %s12
  %s15 = scalar_select 0, %s14, %s12
  $region1: #{tpu_custom_call.1} parent=0
    #allocation2 [shape = 'u8[2048]{0}', space=vmem, size = 0x800, scoped, tag = 'output window, operand 0, single buffered']
    #allocation3 [shape = 's32[1]{0}', space=sflag, size = 0x4, scoped, tag = 'scoped memory for tpu_custom_call.1']
    %16 = vsyncpa [#allocation3], 0
    // Predicated region
    $region2: #{tpu_custom_call.1} parent=1 // pred_check
      _
    $region3: #{tpu_custom_call.1} parent=1 // pred_check_branch
      %18 = sbr.rel (0) target = $region5
    $region4: #{tpu_custom_call.1} parent=1 // pred_region
      _
    $region5: #{tpu_custom_call.1} parent=1 // pred_fallthru
      _
    // Predicated region
    $region6: #{tpu_custom_call.1} parent=1 // pred_check
      _
    $region7: #{tpu_custom_call.1} parent=1 // pred_check_branch
      %20 = sbr.rel (0) target = $region9
    $region8: #{tpu_custom_call.1} parent=1 // pred_region
      _
    $region9: #{tpu_custom_call.1} parent=1 // pred_fallthru
      _
    // Predicated region
    $region10: #{tpu_custom_call.1} parent=1 // pred_check
      _
    $region11: #{tpu_custom_call.1} parent=1 // pred_check_branch
      %22 = sbr.rel (0) target = $region13
    $region12: #{tpu_custom_call.1} parent=1 // pred_region
      _
    $region13: #{tpu_custom_call.1} parent=1 // pred_fallthru
      _
    // Predicated region
    $region14: #{tpu_custom_call.1} parent=1 // pred_check
      _
    $region15: #{tpu_custom_call.1} parent=1 // pred_check_branch
      %24 = sbr.rel (0) target = $region17
    $region16: #{tpu_custom_call.1} parent=1 // pred_region
      _
    $region17: #{tpu_custom_call.1} parent=1 // pred_fallthru
      _
    // Predicated region
    $region18: #{tpu_custom_call.1} parent=1 // pred_check
      _
    $region19: #{tpu_custom_call.1} parent=1 // pred_check_branch
      %26 = sbr.rel (0) target = $region21
    $region20: #{tpu_custom_call.1} parent=1 // pred_region
      _
    $region21: #{tpu_custom_call.1} parent=1 // pred_fallthru
      _
    // Predicated region
    $region22: #{tpu_custom_call.1} parent=1 // pred_check
      _
    $region23: #{tpu_custom_call.1} parent=1 // pred_check_branch
      %28 = sbr.rel (0) target = $region25
    $region24: #{tpu_custom_call.1} parent=1 // pred_region
      _
    $region25: #{tpu_custom_call.1} parent=1 // pred_fallthru
      _
    // Predicated region
    $region26: #{tpu_custom_call.1} parent=1 // pred_check
      _
    $region27: #{tpu_custom_call.1} parent=1 // pred_check_branch
      %30 = sbr.rel (0) target = $region29
    $region28: #{tpu_custom_call.1} parent=1 // pred_region
      _
    $region29: #{tpu_custom_call.1} parent=1 // pred_fallthru
      _
    // Predicated region
    $region30: #{tpu_custom_call.1} parent=1 // pred_check
      _
    $region31: #{tpu_custom_call.1} parent=1 // pred_check_branch
      %32 = sbr.rel (0) target = $region33
    $region32: #{tpu_custom_call.1} parent=1 // pred_region
      _
    $region33: #{tpu_custom_call.1} parent=1 // pred_fallthru
      _
    // Predicated region
    $region34: #{tpu_custom_call.1} parent=1 // pred_check
      _
    $region35: #{tpu_custom_call.1} parent=1 // pred_check_branch
      %34 = sbr.rel (0) target = $region37
    $region36: #{tpu_custom_call.1} parent=1 // pred_region
      _
    $region37: #{tpu_custom_call.1} parent=1 // pred_fallthru
      _
    // Predicated region
    $region38: #{tpu_custom_call.1} parent=1 // pred_check
      _
    $region39: #{tpu_custom_call.1} parent=1 // pred_check_branch
      %36 = sbr.rel (0) target = $region41
    $region40: #{tpu_custom_call.1} parent=1 // pred_region
      _
    $region41: #{tpu_custom_call.1} parent=1 // pred_fallthru
      _
    // Predicated region
    $region42: #{tpu_custom_call.1} parent=1 // pred_check
      _
    $region43: #{tpu_custom_call.1} parent=1 // pred_check_branch
      %38 = sbr.rel (0) target = $region45
    $region44: #{tpu_custom_call.1} parent=1 // pred_region
      _
    $region45: #{tpu_custom_call.1} parent=1 // pred_fallthru
      _
    %v40 = vld [vmem:[%s0] sm:$0xff]
    %v41 = vpack.c.bf16 %v40, %v40
    %v42 = vld [vmem:[%s1] sm:$0xf]
    %v43 = vld [vmem:[%s1 + $0x4] sm:$0xf]
    %v44 = vld [vmem:[%s1 + $0x8] sm:$0xf]
    %v45 = vld [vmem:[%s1 + $0xc] sm:$0xf]
    %v46 = vld [vmem:[%s1 + $0x10] sm:$0xf]
    %v47 = vld [vmem:[%s1 + $0x14] sm:$0xf]
    %v48 = vld [vmem:[%s1 + $0x18] sm:$0x1]
    %v49 = vld [vmem:[%s2] sm:$0xff]
    %v50 = vld [vmem:[%s2 + $0x8] sm:$0xff]
    %v51 = vld [vmem:[%s2 + $0x10] sm:$0xff]
    %v52 = vld [vmem:[%s2 + $0x18] sm:$0xff]
    %v53 = vld [vmem:[%s2 + $0x20] sm:$0xff]
    %v54 = vld [vmem:[%s2 + $0x28] sm:$0xff]
    %v55 = vld [vmem:[%s2 + $0x30] sm:$0x3]
    %57 = vset.pattern.permute.xlu0 0
    %58 = vperm.xlu0 %57, %v49
    %v59 = vpop.permute.xlu0 %58
    %62 = vset.pattern.permute.xlu0 0
    %63 = vperm.xlu0 %62, %v50
    %v64 = vpop.permute.xlu0 %63
    %67 = vset.pattern.permute.xlu0 0
    %68 = vperm.xlu0 %67, %v51
    %v69 = vpop.permute.xlu0 %68
    %72 = vset.pattern.permute.xlu0 0
    %73 = vperm.xlu0 %72, %v52
    %v74 = vpop.permute.xlu0 %73
    %77 = vset.pattern.permute.xlu0 0
    %78 = vperm.xlu0 %77, %v53
    %v79 = vpop.permute.xlu0 %78
    %82 = vset.pattern.permute.xlu0 0
    %83 = vperm.xlu0 %82, %v54
    %v84 = vpop.permute.xlu0 %83
    %87 = vset.pattern.permute.xlu0 0
    %88 = vperm.xlu0 %87, %v55
    %v89 = vpop.permute.xlu0 %88
    %v98 = vunpack.c.l.b16 %v42
    %v99 = vunpack.c.l.b16 %v43
    %v100 = vunpack.c.l.b16 %v44
    %v101 = vunpack.c.l.b16 %v45
    %v102 = vunpack.c.l.b16 %v46
    %v103 = vunpack.c.l.b16 %v47
    %v104 = vunpack.c.l.b16 %v48
    %v105 = vpack.c.b16 %v99, %v98
    %v106 = vpack.c.b16 %v101, %v100
    %v107 = vpack.c.b16 %v103, %v102
    %v108 = vpack.c.b16 %v104, %v104
    %vm109 = vcmask 261120
    %v111 = vsel %vm109, %v105, 0
    %v114 = vsel %vm109, %v106, 0
    %v117 = vsel %vm109, %v107, 0
    %v120 = vsel %vm109, %v108, 0
    %v123 = vsel %vm109, %v41, 0
    %125 = vmatprep.subr.bf16.mxu0 0
    %126 = vmatpush1.bf16.xpose.msra.mxu0 %v123
    %127 = vmatprep.subr.bf16.mxu0 0
    %128 = vmatpush1.bf16.xpose.msra.mxu0 0
    %129 = vmatprep.subr.bf16.mxu0 0
    %130 = vmatpush1.bf16.xpose.msra.mxu0 0
    %131 = vmatprep.subr.bf16.mxu0 0
    %132 = vmatpush1.bf16.xpose.msra.mxu0 0
    %133 = vmatprep.subr.bf16.mxu0 0
    %134 = vmatpush1.bf16.xpose.msra.mxu0 0
    %135 = vmatprep.subr.bf16.mxu0 0
    %136 = vmatpush1.bf16.xpose.msra.mxu0 0
    %137 = vmatprep.subr.bf16.mxu0 0
    %138 = vmatpush1.bf16.xpose.msra.mxu0 0
    %139 = vmatprep.subr.bf16.mxu0 0
    %140 = vmatpush1.bf16.xpose.msra.mxu0 0
    %141 = vmatprep.subr.bf16.mxu0 0
    %142 = vmatpush1.bf16.xpose.msra.mxu0 0
    %143 = vmatprep.subr.bf16.mxu0 0
    %144 = vmatpush1.bf16.xpose.msra.mxu0 0
    %145 = vmatprep.subr.bf16.mxu0 0
    %146 = vmatpush1.bf16.xpose.msra.mxu0 0
    %147 = vmatprep.subr.bf16.mxu0 0
    %148 = vmatpush1.bf16.xpose.msra.mxu0 0
    %149 = vmatprep.subr.bf16.mxu0 0
    %150 = vmatpush1.bf16.xpose.msra.mxu0 0
    %151 = vmatprep.subr.bf16.mxu0 0
    %152 = vmatpush1.bf16.xpose.msra.mxu0 0
    %153 = vmatprep.subr.bf16.mxu0 0
    %154 = vmatpush1.bf16.xpose.msra.mxu0 0
    %155 = vmatprep.subr.bf16.mxu0 0
    %156 = vmatpush1.bf16.xpose.msra.mxu0 0
    %157 = vmatprep.mubr.bf16.mxu0 0
    %158 = vmatmul.mubr.bf16.gmra.mrb[0].mxu0 %v111
    %v159 = vpop.f32.mrb[0].mxu0
    %v160 = vadd.f32 %v59, %v159
    %v161 = vpop.f32.mrb[0].mxu0
    %v162 = vpop.f32.mrb[0].mxu0
    %v163 = vadd.f32 %v64, %v162
    %v164 = vpop.f32.mrb[0].mxu0
    %165 = vmatprep.mubr.bf16.mxu0 0
    %166 = vmatmul.mubr.bf16.gmra.mrb[0].mxu0 %v114
    %v167 = vpop.f32.mrb[0].mxu0
    %v168 = vadd.f32 %v69, %v167
    %v169 = vpop.f32.mrb[0].mxu0
    %v170 = vpop.f32.mrb[0].mxu0
    %v171 = vadd.f32 %v74, %v170
    %v172 = vpop.f32.mrb[0].mxu0
    %173 = vmatprep.mubr.bf16.mxu0 0
    %174 = vmatmul.mubr.bf16.gmra.mrb[0].mxu0 %v117
    %v175 = vpop.f32.mrb[0].mxu0
    %v176 = vadd.f32 %v79, %v175
    %v177 = vpop.f32.mrb[0].mxu0
    %v178 = vpop.f32.mrb[0].mxu0
    %v179 = vadd.f32 %v84, %v178
    %v180 = vpop.f32.mrb[0].mxu0
    %181 = vmatprep.mubr.bf16.mxu0 0
    %182 = vmatmul.mubr.bf16.gmra.mrb[0].mxu0 %v120
    %v183 = vpop.f32.mrb[0].mxu0
    %v184 = vadd.f32 %v89, %v183
    %v185 = vpop.f32.mrb[0].mxu0
    %v186 = vpop.f32.mrb[0].mxu0
    %v187 = vpop.f32.mrb[0].mxu0
    %188 = vdwg.mxu0
    %v189 = vmax.f32 %v160, 0.0
    %v190 = vmax.f32 %v163, 0.0
    %v191 = vmax.f32 %v168, 0.0
    %v192 = vmax.f32 %v171, 0.0
    %v193 = vmax.f32 %v176, 0.0
    %v194 = vmax.f32 %v179, 0.0
    %v195 = vmax.f32 %v184, 0.0
    %v196 = vld [vmem:[%s3] sm:$0xf]
    %v197 = vld [vmem:[%s3 + $0x4] sm:$0xf]
    %v198 = vld [vmem:[%s3 + $0x8] sm:$0xf]
    %v199 = vld [vmem:[%s3 + $0xc] sm:$0xf]
    %v200 = vld [vmem:[%s3 + $0x10] sm:$0xf]
    %v201 = vld [vmem:[%s3 + $0x14] sm:$0xf]
    %v202 = vld [vmem:[%s3 + $0x18] sm:$0xf]
    %v203 = vld [vmem:[%s3 + $0x1c] sm:$0xf]
    %v204 = vld [vmem:[%s3 + $0x20] sm:$0xf]
    %v205 = vld [vmem:[%s3 + $0x24] sm:$0xf]
    %v206 = vld [vmem:[%s3 + $0x28] sm:$0xf]
    %v207 = vld [vmem:[%s3 + $0x2c] sm:$0xf]
    %v208 = vld [vmem:[%s3 + $0x30] sm:$0x3]
    %v209 = vpack.c.bf16 %v190, %v189
    %v210 = vpack.c.bf16 %v192, %v191
    %v211 = vpack.c.bf16 %v194, %v193
    %v212 = vpack.c.bf16 %v195, %v195
    %v213 = vld [vmem:[%s4] sm:$0xff]
    %v214 = vld [vmem:[%s4 + $0x8] sm:$0xff]
    %v215 = vld [vmem:[%s4 + $0x10] sm:$0xff]
    %v216 = vld [vmem:[%s4 + $0x18] sm:$0xff]
    %v217 = vld [vmem:[%s4 + $0x20] sm:$0xff]
    %v218 = vld [vmem:[%s4 + $0x28] sm:$0xff]
    %v219 = vld [vmem:[%s4 + $0x30] sm:$0xff]
    %v220 = vld [vmem:[%s4 + $0x38] sm:$0xff]
    %v221 = vld [vmem:[%s4 + $0x40] sm:$0xff]
    %v222 = vld [vmem:[%s4 + $0x48] sm:$0xff]
    %v223 = vld [vmem:[%s4 + $0x50] sm:$0xff]
    %v224 = vld [vmem:[%s4 + $0x58] sm:$0xff]
    %v225 = vld [vmem:[%s4 + $0x60] sm:$0xf]
    %227 = vset.pattern.permute.xlu0 0
    %228 = vperm.xlu0 %227, %v213
    %v229 = vpop.permute.xlu0 %228
    %232 = vset.pattern.permute.xlu0 0
    %233 = vperm.xlu0 %232, %v214
    %v234 = vpop.permute.xlu0 %233
    %237 = vset.pattern.permute.xlu0 0
    %238 = vperm.xlu0 %237, %v215
    %v239 = vpop.permute.xlu0 %238
    %242 = vset.pattern.permute.xlu0 0
    %243 = vperm.xlu0 %242, %v216
    %v244 = vpop.permute.xlu0 %243
    %247 = vset.pattern.permute.xlu0 0
    %248 = vperm.xlu0 %247, %v217
    %v249 = vpop.permute.xlu0 %248
    %252 = vset.pattern.permute.xlu0 0
    %253 = vperm.xlu0 %252, %v218
    %v254 = vpop.permute.xlu0 %253
    %257 = vset.pattern.permute.xlu0 0
    %258 = vperm.xlu0 %257, %v219
    %v259 = vpop.permute.xlu0 %258
    %262 = vset.pattern.permute.xlu0 0
    %263 = vperm.xlu0 %262, %v220
    %v264 = vpop.permute.xlu0 %263
    %267 = vset.pattern.permute.xlu0 0
    %268 = vperm.xlu0 %267, %v221
    %v269 = vpop.permute.xlu0 %268
    %272 = vset.pattern.permute.xlu0 0
    %273 = vperm.xlu0 %272, %v222
    %v274 = vpop.permute.xlu0 %273
    %277 = vset.pattern.permute.xlu0 0
    %278 = vperm.xlu0 %277, %v223
    %v279 = vpop.permute.xlu0 %278
    %282 = vset.pattern.permute.xlu0 0
    %283 = vperm.xlu0 %282, %v224
    %v284 = vpop.permute.xlu0 %283
    %287 = vset.pattern.permute.xlu0 0
    %288 = vperm.xlu0 %287, %v225
    %v289 = vpop.permute.xlu0 %288
    %v304 = vunpack.c.l.b16 %v196
    %v305 = vunpack.c.l.b16 %v197
    %v306 = vunpack.c.l.b16 %v198
    %v307 = vunpack.c.l.b16 %v199
    %v308 = vunpack.c.l.b16 %v200
    %v309 = vunpack.c.l.b16 %v201
    %v310 = vunpack.c.l.b16 %v202
    %v311 = vunpack.c.l.b16 %v203
    %v312 = vunpack.c.l.b16 %v204
    %v313 = vunpack.c.l.b16 %v205
    %v314 = vunpack.c.l.b16 %v206
    %v315 = vunpack.c.l.b16 %v207
    %v316 = vunpack.c.l.b16 %v208
    %v317 = vpack.c.b16 %v305, %v304
    %v318 = vpack.c.b16 %v307, %v306
    %v319 = vpack.c.b16 %v309, %v308
    %v320 = vpack.c.b16 %v311, %v310
    %v321 = vpack.c.b16 %v313, %v312
    %v322 = vpack.c.b16 %v315, %v314
    %v323 = vpack.c.b16 %v316, %v316
    %vm324 = vcmask 408576
    %v326 = vsel %vm324, %v317, 0
    %v329 = vsel %vm324, %v318, 0
    %v332 = vsel %vm324, %v319, 0
    %v335 = vsel %vm324, %v320, 0
    %v338 = vsel %vm324, %v321, 0
    %v341 = vsel %vm324, %v322, 0
    %v344 = vsel %vm324, %v323, 0
    %vm346 = vcmask 1040384
    %v348 = vsel %vm346, %v212, 0
    %350 = vmatprep.subr.bf16.mxu0 0
    %351 = vmatpush1.bf16.msra.mxu0 %v209
    %352 = vmatprep.subr.bf16.mxu0 0
    %353 = vmatpush1.bf16.msra.mxu0 %v210
    %354 = vmatprep.subr.bf16.mxu0 0
    %355 = vmatpush1.bf16.msra.mxu0 %v211
    %356 = vmatprep.subr.bf16.mxu0 0
    %357 = vmatpush1.bf16.msra.mxu0 %v348
    %358 = vmatprep.subr.bf16.mxu0 0
    %359 = vmatpush1.bf16.msra.mxu0 0
    %360 = vmatprep.subr.bf16.mxu0 0
    %361 = vmatpush1.bf16.msra.mxu0 0
    %362 = vmatprep.subr.bf16.mxu0 0
    %363 = vmatpush1.bf16.msra.mxu0 0
    %364 = vmatprep.subr.bf16.mxu0 0
    %365 = vmatpush1.bf16.msra.mxu0 0
    %366 = vmatprep.subr.bf16.mxu0 0
    %367 = vmatpush1.bf16.msra.mxu0 0
    %368 = vmatprep.subr.bf16.mxu0 0
    %369 = vmatpush1.bf16.msra.mxu0 0
    %370 = vmatprep.subr.bf16.mxu0 0
    %371 = vmatpush1.bf16.msra.mxu0 0
    %372 = vmatprep.subr.bf16.mxu0 0
    %373 = vmatpush1.bf16.msra.mxu0 0
    %374 = vmatprep.subr.bf16.mxu0 0
    %375 = vmatpush1.bf16.msra.mxu0 0
    %376 = vmatprep.subr.bf16.mxu0 0
    %377 = vmatpush1.bf16.msra.mxu0 0
    %378 = vmatprep.subr.bf16.mxu0 0
    %379 = vmatpush1.bf16.msra.mxu0 0
    %380 = vmatprep.subr.bf16.mxu0 0
    %381 = vmatpush1.bf16.msra.mxu0 0
    %382 = vmatprep.mubr.bf16.mxu0 0
    %383 = vmatmul.mubr.bf16.gmra.mrb[0].mxu0 %v326
    %v384 = vpop.f32.mrb[0].mxu0
    %v385 = vadd.f32 %v229, %v384
    %v386 = vpop.f32.mrb[0].mxu0
    %v387 = vpop.f32.mrb[0].mxu0
    %v388 = vadd.f32 %v234, %v387
    %v389 = vpop.f32.mrb[0].mxu0
    %390 = vmatprep.mubr.bf16.mxu0 0
    %391 = vmatmul.mubr.bf16.gmra.mrb[0].mxu0 %v329
    %v392 = vpop.f32.mrb[0].mxu0
    %v393 = vadd.f32 %v239, %v392
    %v394 = vpop.f32.mrb[0].mxu0
    %v395 = vpop.f32.mrb[0].mxu0
    %v396 = vadd.f32 %v244, %v395
    %v397 = vpop.f32.mrb[0].mxu0
    %398 = vmatprep.mubr.bf16.mxu0 0
    %399 = vmatmul.mubr.bf16.gmra.mrb[0].mxu0 %v332
    %v400 = vpop.f32.mrb[0].mxu0
    %v401 = vadd.f32 %v249, %v400
    %v402 = vpop.f32.mrb[0].mxu0
    %v403 = vpop.f32.mrb[0].mxu0
    %v404 = vadd.f32 %v254, %v403
    %v405 = vpop.f32.mrb[0].mxu0
    %406 = vmatprep.mubr.bf16.mxu0 0
    %407 = vmatmul.mubr.bf16.gmra.mrb[0].mxu0 %v335
    %v408 = vpop.f32.mrb[0].mxu0
    %v409 = vadd.f32 %v259, %v408
    %v410 = vpop.f32.mrb[0].mxu0
    %v411 = vpop.f32.mrb[0].mxu0
    %v412 = vadd.f32 %v264, %v411
    %v413 = vpop.f32.mrb[0].mxu0
    %414 = vmatprep.mubr.bf16.mxu0 0
    %415 = vmatmul.mubr.bf16.gmra.mrb[0].mxu0 %v338
    %v416 = vpop.f32.mrb[0].mxu0
    %v417 = vadd.f32 %v269, %v416
    %v418 = vpop.f32.mrb[0].mxu0
    %v419 = vpop.f32.mrb[0].mxu0
    %v420 = vadd.f32 %v274, %v419
    %v421 = vpop.f32.mrb[0].mxu0
    %422 = vmatprep.mubr.bf16.mxu0 0
    %423 = vmatmul.mubr.bf16.gmra.mrb[0].mxu0 %v341
    %v424 = vpop.f32.mrb[0].mxu0
    %v425 = vadd.f32 %v279, %v424
    %v426 = vpop.f32.mrb[0].mxu0
    %v427 = vpop.f32.mrb[0].mxu0
    %v428 = vadd.f32 %v284, %v427
    %v429 = vpop.f32.mrb[0].mxu0
    %430 = vmatprep.mubr.bf16.mxu0 0
    %431 = vmatmul.mubr.bf16.gmra.mrb[0].mxu0 %v344
    %v432 = vpop.f32.mrb[0].mxu0
    %v433 = vadd.f32 %v289, %v432
    %v434 = vpop.f32.mrb[0].mxu0
    %v435 = vpop.f32.mrb[0].mxu0
    %v436 = vpop.f32.mrb[0].mxu0
    %437 = vdwg.mxu0
    %v438 = vmax.f32 %v385, 0.0
    %v439 = vmax.f32 %v388, 0.0
    %v440 = vmax.f32 %v393, 0.0
    %v441 = vmax.f32 %v396, 0.0
    %v442 = vmax.f32 %v401, 0.0
    %v443 = vmax.f32 %v404, 0.0
    %v444 = vmax.f32 %v409, 0.0
    %v445 = vmax.f32 %v412, 0.0
    %v446 = vmax.f32 %v417, 0.0
    %v447 = vmax.f32 %v420, 0.0
    %v448 = vmax.f32 %v425, 0.0
    %v449 = vmax.f32 %v428, 0.0
    %v450 = vmax.f32 %v433, 0.0
    %v451 = vld [vmem:[%s5] sm:$0xf]
    %v452 = vld [vmem:[%s5 + $0x4] sm:$0xf]
    %v453 = vld [vmem:[%s5 + $0x8] sm:$0xf]
    %v454 = vld [vmem:[%s5 + $0xc] sm:$0xf]
    %v455 = vld [vmem:[%s5 + $0x10] sm:$0xf]
    %v456 = vld [vmem:[%s5 + $0x14] sm:$0xf]
    %v457 = vld [vmem:[%s5 + $0x18] sm:$0x1]
    %v458 = vpack.c.bf16 %v439, %v438
    %v459 = vpack.c.bf16 %v441, %v440
    %v460 = vpack.c.bf16 %v443, %v442
    %v461 = vpack.c.bf16 %v445, %v444
    %v462 = vpack.c.bf16 %v447, %v446
    %v463 = vpack.c.bf16 %v449, %v448
    %v464 = vpack.c.bf16 %v450, %v450
    %v465 = vld [vmem:[%s6] sm:$0xff]
    %v466 = vld [vmem:[%s6 + $0x8] sm:$0xff]
    %v467 = vld [vmem:[%s6 + $0x10] sm:$0xff]
    %v468 = vld [vmem:[%s6 + $0x18] sm:$0xff]
    %v469 = vld [vmem:[%s6 + $0x20] sm:$0xff]
    %v470 = vld [vmem:[%s6 + $0x28] sm:$0xff]
    %v471 = vld [vmem:[%s6 + $0x30] sm:$0x3]
    %473 = vset.pattern.permute.xlu0 0
    %474 = vperm.xlu0 %473, %v465
    %v475 = vpop.permute.xlu0 %474
    %478 = vset.pattern.permute.xlu0 0
    %479 = vperm.xlu0 %478, %v466
    %v480 = vpop.permute.xlu0 %479
    %483 = vset.pattern.permute.xlu0 0
    %484 = vperm.xlu0 %483, %v467
    %v485 = vpop.permute.xlu0 %484
    %488 = vset.pattern.permute.xlu0 0
    %489 = vperm.xlu0 %488, %v468
    %v490 = vpop.permute.xlu0 %489
    %493 = vset.pattern.permute.xlu0 0
    %494 = vperm.xlu0 %493, %v469
    %v495 = vpop.permute.xlu0 %494
    %498 = vset.pattern.permute.xlu0 0
    %499 = vperm.xlu0 %498, %v470
    %v500 = vpop.permute.xlu0 %499
    %503 = vset.pattern.permute.xlu0 0
    %504 = vperm.xlu0 %503, %v471
    %v505 = vpop.permute.xlu0 %504
    %v514 = vunpack.c.l.b16 %v451
    %v515 = vunpack.c.l.b16 %v452
    %v516 = vunpack.c.l.b16 %v453
    %v517 = vunpack.c.l.b16 %v454
    %v518 = vunpack.c.l.b16 %v455
    %v519 = vunpack.c.l.b16 %v456
    %v520 = vunpack.c.l.b16 %v457
    %v521 = vpack.c.b16 %v515, %v514
    %v522 = vpack.c.b16 %v517, %v516
    %v523 = vpack.c.b16 %v519, %v518
    %v524 = vpack.c.b16 %v520, %v520
    %vm525 = vcmask 818176
    %v527 = vsel %vm525, %v521, 0
    %v530 = vsel %vm525, %v522, 0
    %v533 = vsel %vm525, %v523, 0
    %v536 = vsel %vm525, %v524, 0
    %vm538 = vcmask 1041408
    %v540 = vsel %vm538, %v464, 0
    %542 = vmatprep.subr.bf16.mxu0 0
    %543 = vmatpush1.bf16.msra.mxu0 %v458
    %544 = vmatprep.subr.bf16.mxu0 0
    %545 = vmatpush1.bf16.msra.mxu0 %v459
    %546 = vmatprep.subr.bf16.mxu0 0
    %547 = vmatpush1.bf16.msra.mxu0 %v460
    %548 = vmatprep.subr.bf16.mxu0 0
    %549 = vmatpush1.bf16.msra.mxu0 %v461
    %550 = vmatprep.subr.bf16.mxu0 0
    %551 = vmatpush1.bf16.msra.mxu0 %v462
    %552 = vmatprep.subr.bf16.mxu0 0
    %553 = vmatpush1.bf16.msra.mxu0 %v463
    %554 = vmatprep.subr.bf16.mxu0 0
    %555 = vmatpush1.bf16.msra.mxu0 %v540
    %556 = vmatprep.subr.bf16.mxu0 0
    %557 = vmatpush1.bf16.msra.mxu0 0
    %558 = vmatprep.subr.bf16.mxu0 0
    %559 = vmatpush1.bf16.msra.mxu0 0
    %560 = vmatprep.subr.bf16.mxu0 0
    %561 = vmatpush1.bf16.msra.mxu0 0
    %562 = vmatprep.subr.bf16.mxu0 0
    %563 = vmatpush1.bf16.msra.mxu0 0
    %564 = vmatprep.subr.bf16.mxu0 0
    %565 = vmatpush1.bf16.msra.mxu0 0
    %566 = vmatprep.subr.bf16.mxu0 0
    %567 = vmatpush1.bf16.msra.mxu0 0
    %568 = vmatprep.subr.bf16.mxu0 0
    %569 = vmatpush1.bf16.msra.mxu0 0
    %570 = vmatprep.subr.bf16.mxu0 0
    %571 = vmatpush1.bf16.msra.mxu0 0
    %572 = vmatprep.subr.bf16.mxu0 0
    %573 = vmatpush1.bf16.msra.mxu0 0
    %574 = vmatprep.mubr.bf16.mxu0 0
    %575 = vmatmul.mubr.bf16.gmra.mrb[0].mxu0 %v527
    %v576 = vpop.f32.mrb[0].mxu0
    %v577 = vadd.f32 %v475, %v576
    %v578 = vpop.f32.mrb[0].mxu0
    %v579 = vpop.f32.mrb[0].mxu0
    %v580 = vadd.f32 %v480, %v579
    %v581 = vpop.f32.mrb[0].mxu0
    %582 = vmatprep.mubr.bf16.mxu0 0
    %583 = vmatmul.mubr.bf16.gmra.mrb[0].mxu0 %v530
    %v584 = vpop.f32.mrb[0].mxu0
    %v585 = vadd.f32 %v485, %v584
    %v586 = vpop.f32.mrb[0].mxu0
    %v587 = vpop.f32.mrb[0].mxu0
    %v588 = vadd.f32 %v490, %v587
    %v589 = vpop.f32.mrb[0].mxu0
    %590 = vmatprep.mubr.bf16.mxu0 0
    %591 = vmatmul.mubr.bf16.gmra.mrb[0].mxu0 %v533
    %v592 = vpop.f32.mrb[0].mxu0
    %v593 = vadd.f32 %v495, %v592
    %v594 = vpop.f32.mrb[0].mxu0
    %v595 = vpop.f32.mrb[0].mxu0
    %v596 = vadd.f32 %v500, %v595
    %v597 = vpop.f32.mrb[0].mxu0
    %598 = vmatprep.mubr.bf16.mxu0 0
    %599 = vmatmul.mubr.bf16.gmra.mrb[0].mxu0 %v536
    %v600 = vpop.f32.mrb[0].mxu0
    %v601 = vadd.f32 %v505, %v600
    %v602 = vpop.f32.mrb[0].mxu0
    %v603 = vpop.f32.mrb[0].mxu0
    %v604 = vpop.f32.mrb[0].mxu0
    %605 = vdwg.mxu0
    %v606 = vmax.f32 %v577, 0.0
    %v607 = vmax.f32 %v580, 0.0
    %v608 = vmax.f32 %v585, 0.0
    %v609 = vmax.f32 %v588, 0.0
    %v610 = vmax.f32 %v593, 0.0
    %v611 = vmax.f32 %v596, 0.0
    %v612 = vmax.f32 %v601, 0.0
    %v613 = vld [vmem:[%s7] sm:$0xf]
    %v614 = vld [vmem:[%s7 + $0x4] sm:$0x1]
    %v615 = vpack.c.bf16 %v607, %v606
    %v616 = vpack.c.bf16 %v609, %v608
    %v617 = vpack.c.bf16 %v611, %v610
    %v618 = vpack.c.bf16 %v612, %v612
    %v619 = vld [vmem:[%s8] sm:$0xff]
    %v620 = vld [vmem:[%s8 + $0x8] sm:$0x3]
    %622 = vset.pattern.permute.xlu0 0
    %623 = vperm.xlu0 %622, %v619
    %v624 = vpop.permute.xlu0 %623
    %627 = vset.pattern.permute.xlu0 0
    %628 = vperm.xlu0 %627, %v620
    %v629 = vpop.permute.xlu0 %628
    %v633 = vunpack.c.l.b16 %v613
    %v634 = vunpack.c.l.b16 %v614
    %v635 = vpack.c.b16 %v634, %v633
    %v637 = vsel %vm324, %v635, 0
    %v640 = vsel %vm346, %v618, 0
    %642 = vmatprep.subr.bf16.mxu0 0
    %643 = vmatpush1.bf16.msra.mxu0 %v615
    %644 = vmatprep.subr.bf16.mxu0 0
    %645 = vmatpush1.bf16.msra.mxu0 %v616
    %646 = vmatprep.subr.bf16.mxu0 0
    %647 = vmatpush1.bf16.msra.mxu0 %v617
    %648 = vmatprep.subr.bf16.mxu0 0
    %649 = vmatpush1.bf16.msra.mxu0 %v640
    %650 = vmatprep.subr.bf16.mxu0 0
    %651 = vmatpush1.bf16.msra.mxu0 0
    %652 = vmatprep.subr.bf16.mxu0 0
    %653 = vmatpush1.bf16.msra.mxu0 0
    %654 = vmatprep.subr.bf16.mxu0 0
    %655 = vmatpush1.bf16.msra.mxu0 0
    %656 = vmatprep.subr.bf16.mxu0 0
    %657 = vmatpush1.bf16.msra.mxu0 0
    %658 = vmatprep.subr.bf16.mxu0 0
    %659 = vmatpush1.bf16.msra.mxu0 0
    %660 = vmatprep.subr.bf16.mxu0 0
    %661 = vmatpush1.bf16.msra.mxu0 0
    %662 = vmatprep.subr.bf16.mxu0 0
    %663 = vmatpush1.bf16.msra.mxu0 0
    %664 = vmatprep.subr.bf16.mxu0 0
    %665 = vmatpush1.bf16.msra.mxu0 0
    %666 = vmatprep.subr.bf16.mxu0 0
    %667 = vmatpush1.bf16.msra.mxu0 0
    %668 = vmatprep.subr.bf16.mxu0 0
    %669 = vmatpush1.bf16.msra.mxu0 0
    %670 = vmatprep.subr.bf16.mxu0 0
    %671 = vmatpush1.bf16.msra.mxu0 0
    %672 = vmatprep.subr.bf16.mxu0 0
    %673 = vmatpush1.bf16.msra.mxu0 0
    %674 = vmatprep.mubr.bf16.mxu0 0
    %675 = vmatmul.mubr.bf16.gmra.mrb[0].mxu0 %v637
    %v676 = vpop.f32.mrb[0].mxu0
    %v677 = vadd.f32 %v624, %v676
    %v678 = vpop.f32.mrb[0].mxu0
    %v679 = vpop.f32.mrb[0].mxu0
    %v680 = vadd.f32 %v629, %v679
    %v681 = vpop.f32.mrb[0].mxu0
    %682 = vdwg.mxu0
    %v683 = vmax.f32 %v677, 0.0
    %v684 = vmax.f32 %v680, 0.0
    %v685 = vld [vmem:[%s9] sm:$0x3]
    %v686 = vpack.c.bf16 %v684, %v683
    %v687 = vld [vmem:[%s10] sm:$0xf]
    %689 = vset.pattern.permute.xlu0 0
    %690 = vperm.xlu0 %689, %v687
    %v691 = vpop.permute.xlu0 %690
    %vm693 = vcmask 80896
    %v695 = vsel %vm693, %v685, 0
    %vm697 = vcmask 1044480
    %v699 = vsel %vm697, %v686, 0
    %701 = vmatprep.subr.bf16.mxu0 0
    %702 = vmatpush1.bf16.msra.mxu0 %v699
    %703 = vmatprep.subr.bf16.mxu0 0
    %704 = vmatpush1.bf16.msra.mxu0 0
    %705 = vmatprep.subr.bf16.mxu0 0
    %706 = vmatpush1.bf16.msra.mxu0 0
    %707 = vmatprep.subr.bf16.mxu0 0
    %708 = vmatpush1.bf16.msra.mxu0 0
    %709 = vmatprep.subr.bf16.mxu0 0
    %710 = vmatpush1.bf16.msra.mxu0 0
    %711 = vmatprep.subr.bf16.mxu0 0
    %712 = vmatpush1.bf16.msra.mxu0 0
    %713 = vmatprep.subr.bf16.mxu0 0
    %714 = vmatpush1.bf16.msra.mxu0 0
    %715 = vmatprep.subr.bf16.mxu0 0
    %716 = vmatpush1.bf16.msra.mxu0 0
    %717 = vmatprep.subr.bf16.mxu0 0
    %718 = vmatpush1.bf16.msra.mxu0 0
    %719 = vmatprep.subr.bf16.mxu0 0
    %720 = vmatpush1.bf16.msra.mxu0 0
    %721 = vmatprep.subr.bf16.mxu0 0
    %722 = vmatpush1.bf16.msra.mxu0 0
    %723 = vmatprep.subr.bf16.mxu0 0
    %724 = vmatpush1.bf16.msra.mxu0 0
    %725 = vmatprep.subr.bf16.mxu0 0
    %726 = vmatpush1.bf16.msra.mxu0 0
    %727 = vmatprep.subr.bf16.mxu0 0
    %728 = vmatpush1.bf16.msra.mxu0 0
    %729 = vmatprep.subr.bf16.mxu0 0
    %730 = vmatpush1.bf16.msra.mxu0 0
    %731 = vmatprep.subr.bf16.mxu0 0
    %732 = vmatpush1.bf16.msra.mxu0 0
    %733 = vmatprep.mubr.bf16.mxu0 0
    %734 = vmatmul.mubr.bf16.gmra.mrb[0].mxu0 %v695
    %v735 = vpop.f32.mrb[0].mxu0
    %v736 = vadd.f32 %v691, %v735
    %v737 = vpop.f32.mrb[0].mxu0
    %v738 = vpop.f32.mrb[0].mxu0
    %v739 = vpop.f32.mrb[0].mxu0
    %740 = vdwg.mxu0
    %vm741 = vcmask 60416
    %742 = vst.msk [vmem:[#allocation2] sm:$0xf] %vm741, %v736
    // Predicated region
    $region46: #{tpu_custom_call.1} parent=1 // pred_check
      _
    $region47: #{tpu_custom_call.1} parent=1 // pred_check_branch
      %744 = sbr.rel (0) target = $region49
    $region48: #{tpu_custom_call.1} parent=1 // pred_region
      %s746 = ssub.s32 64, 64
      %747 = vsyncadd [#allocation3], %s746
      %s749 = sshll.u32 [#allocation2], 4
      %s750 = int_to_ptr.vmem [resolvable:$true] %s749
      %752 = dma.vmem_to_hbm [thread:$0]  %s750, 64, %s11, [#allocation3]
    $region49: #{tpu_custom_call.1} parent=1 // pred_fallthru
      _
    // Predicated region
    $region50: #{tpu_custom_call.1} parent=1 // pred_check
      _
    $region51: #{tpu_custom_call.1} parent=1 // pred_check_branch
      %754 = sbr.rel (0) target = $region53
    $region52: #{tpu_custom_call.1} parent=1 // pred_region
      %755 = dma.done [#allocation3], 64
    $region53: #{tpu_custom_call.1} parent=1 // pred_fallthru
      _
    %756 = vsyncpa [#allocation3], 1

</llo_original>
